<compile_context>
chip_gen: v5e
topology: v5e:2x2
jax: 0.10.0
libtpu: 0.0.40
codegen_flags: <defaults>
</compile_context>

<pallas_src>
import functools

import jax
import jax.numpy as jnp
from jax import lax
from jax.experimental import pallas as pl
from jax.experimental.pallas import tpu as pltpu


_REPR_DIM = 256                      # multiple of 128 -> lane-dense stores
_GOLDEN = 0x9E3779B1                 # seed-mixing constant
_TWO_PI = 6.283185307179586


def _hash_u32(x):
    """lowbias32 finalizer: bijective, well-mixed uint32 -> uint32 (VPU only)."""
    x = x ^ (x >> 16)
    x = x * jnp.uint32(0x7FEB352D)
    x = x ^ (x >> 15)
    x = x * jnp.uint32(0x846CA68B)
    x = x ^ (x >> 16)
    return x


def _bits_to_unit_float(bits):
    """uint32 -> float32 in [1, 2) via exponent bitcast (no int->float convert)."""
    mant = jnp.bitwise_or(bits >> 9, jnp.uint32(0x3F800000))
    return lax.bitcast_convert_type(mant, jnp.float32)


def _randn_kernel(seed_ref, o_ref, *, half_rows, repr_dim):
    """Fill one [2*half_rows, repr_dim] float32 tile with i.i.d. N(0,1) samples."""
    i = pl.program_id(0)

    # Unique counter per (Box-Muller pair, tile).  Counter-based -> grid axis
    # is truly "parallel" and every tile gets an independent stream.
    row = lax.broadcasted_iota(jnp.int32, (half_rows, repr_dim), 0)
    col = lax.broadcasted_iota(jnp.int32, (half_rows, repr_dim), 1)
    cnt = (row + i * half_rows) * repr_dim + col
    cnt = lax.bitcast_convert_type(cnt, jnp.uint32)

    key = seed_ref[0] * jnp.uint32(_GOLDEN)
    b1 = _hash_u32(cnt * jnp.uint32(2) + key)                   # even stream
    b2 = _hash_u32(cnt * jnp.uint32(2) + jnp.uint32(1) + key)   # odd stream

    u1 = 2.0 - _bits_to_unit_float(b1)      # in (0, 1] -> safe log argument
    u2 = _bits_to_unit_float(b2) - 1.0      # in [0, 1)

    # Box-Muller, both branches (2 EUP ops + 1 draw per output element).
    r = jnp.sqrt(-2.0 * jnp.log(u1))
    theta = jnp.float32(_TWO_PI) * u2
    z1 = r * jnp.cos(theta)
    z2 = r * jnp.sin(theta)

    # Sublane-split writes: each store is a full 256-lane unmasked vst.
    o_ref[:half_rows, :] = z1.astype(o_ref.dtype)
    o_ref[half_rows:, :] = z2.astype(o_ref.dtype)


def _round_up(x, m):
    return (x + m - 1) // m * m


def mock_model_forward(states, actions, *, repr_dim=_REPR_DIM, seed=0):
    """Pallas equivalent of MockModel.forward.

    Args:
      states : [B, T, Ch, H, W]  (unused, signature parity with the module)
      actions: [B, T-1, 2]
    Returns:
      predictions: [B, T, repr_dim] float32 standard-normal samples.
    """
    del states  # unused, matches the reference module
    B, t_actions, _ = actions.shape
    t_out = t_actions + 1            # torch: output [B, T+1, D] with T = actions.shape[1]
    n_rows = B * t_out

    # Row tiling: multiples of 16 so each Box-Muller half is sublane-aligned.
    tile_rows = min(1024, _round_up(n_rows, 16))
    padded_rows = _round_up(n_rows, tile_rows)
    grid = (padded_rows // tile_rows,)
    half_rows = tile_rows // 2

    # TODO(synk): torch.randn advances global RNG state; here callers must
    # thread a varying `seed` if call-to-call independence matters.
    seed_arr = jnp.asarray([seed], dtype=jnp.uint32)

    n_pairs = padded_rows * repr_dim // 2
    cost = pl.CostEstimate(
        flops=30 * n_pairs,               # hash + Box-Muller VPU arithmetic
        transcendentals=4 * n_pairs,      # log, sqrt, cos, sin per pair
        bytes_accessed=padded_rows * repr_dim * 4 + 4,
    )

    flat = pl.pallas_call(
        functools.partial(_randn_kernel, half_rows=half_rows, repr_dim=repr_dim),
        out_shape=jax.ShapeDtypeStruct((padded_rows, repr_dim), jnp.float32),
        grid=grid,
        in_specs=[pl.BlockSpec(memory_space=pltpu.MemorySpace.SMEM)],
        out_specs=pl.BlockSpec((tile_rows, repr_dim), lambda i: (i, 0)),
        compiler_params=pltpu.CompilerParams(
            dimension_semantics=("parallel",),
            vmem_limit_bytes=32 * 1024 * 1024,
        ),
        cost_estimate=cost,
    )(seed_arr)

    return flat[:n_rows].reshape(B, t_out, repr_dim)


if __name__ == "__main__":
    key = jax.random.PRNGKey(0)
    k_states, k_actions = jax.random.split(key)

    B, T, Ch, H, W = 2, 8, 4, 16, 16
    states = jax.random.normal(k_states, (B, T, Ch, H, W), dtype=jnp.float32)
    actions = jax.random.normal(k_actions, (B, T - 1, 2), dtype=jnp.float32)

    preds = mock_model_forward(states, actions, repr_dim=256, seed=0)
    preds = jax.block_until_ready(preds)

    assert preds.shape == (B, T, 256), preds.shape
    assert preds.dtype == jnp.float32
    assert bool(jnp.all(jnp.isfinite(preds)))
    mean = float(jnp.mean(preds))
    std = float(jnp.std(preds))
    assert abs(mean) < 0.25 and 0.75 < std < 1.25, (mean, std)
    print("KERNEL_OK")
</pallas_src>

<mosaic_0001>
module attributes {stable_mosaic.version = 11 : i64} {
  func.func @_randn_kernel(%arg0: i32, %arg1: memref<1xi32, #tpu.memory_space<smem>>, %arg2: memref<16x256xf32, #tpu.memory_space<vmem>>) attributes {dimension_semantics = [#tpu.dimension_semantics<parallel>], iteration_bounds = array<i64: 1>, scalar_prefetch = 0 : i64, scratch_operands = 0 : i64, tpu.core_type = #tpu.core_type<tc>, window_params = [{transform_indices = @transform_0, window_bounds = array<i64: 1>}, {transform_indices = @transform_1, window_bounds = array<i64: 16, 256>}]} {
    %0 = tpu.iota {dimensions = array<i32: 0>} : vector<8x256xi32>
    %1 = tpu.iota {dimensions = array<i32: 1>} : vector<8x256xi32>
    %c8_i32 = arith.constant 8 : i32
    %2 = arith.muli %arg0, %c8_i32 : i32
    %3 = vector.broadcast %2 : i32 to vector<8x256xi32>
    %4 = arith.addi %0, %3 : vector<8x256xi32>
    %c256_i32 = arith.constant 256 : i32
    %5 = vector.broadcast %c256_i32 : i32 to vector<8x256xi32>
    %6 = arith.muli %4, %5 : vector<8x256xi32>
    %7 = arith.addi %6, %1 : vector<8x256xi32>
    %8 = tpu.bitcast %7 : vector<8x256xi32> -> vector<8x256xi32>
    %c0 = arith.constant 0 : index
    %9 = memref.load %arg1[%c0] : memref<1xi32, #tpu.memory_space<smem>>
    %c-1640531535_i32 = arith.constant -1640531535 : i32
    %10 = arith.muli %9, %c-1640531535_i32 : i32
    %c2_i32 = arith.constant 2 : i32
    %11 = vector.broadcast %c2_i32 : i32 to vector<8x256xi32>
    %12 = arith.muli %8, %11 : vector<8x256xi32>
    %13 = vector.broadcast %10 : i32 to vector<8x256xi32>
    %14 = arith.addi %12, %13 : vector<8x256xi32>
    %c16_i32 = arith.constant 16 : i32
    %15 = vector.broadcast %c16_i32 : i32 to vector<8x256xi32>
    %16 = arith.shrui %14, %15 : vector<8x256xi32>
    %17 = arith.xori %14, %16 : vector<8x256xi32>
    %c2146121005_i32 = arith.constant 2146121005 : i32
    %18 = vector.broadcast %c2146121005_i32 : i32 to vector<8x256xi32>
    %19 = arith.muli %17, %18 : vector<8x256xi32>
    %c15_i32 = arith.constant 15 : i32
    %20 = vector.broadcast %c15_i32 : i32 to vector<8x256xi32>
    %21 = arith.shrui %19, %20 : vector<8x256xi32>
    %22 = arith.xori %19, %21 : vector<8x256xi32>
    %c-2073254261_i32 = arith.constant -2073254261 : i32
    %23 = vector.broadcast %c-2073254261_i32 : i32 to vector<8x256xi32>
    %24 = arith.muli %22, %23 : vector<8x256xi32>
    %c16_i32_0 = arith.constant 16 : i32
    %25 = vector.broadcast %c16_i32_0 : i32 to vector<8x256xi32>
    %26 = arith.shrui %24, %25 : vector<8x256xi32>
    %27 = arith.xori %24, %26 : vector<8x256xi32>
    %c2_i32_1 = arith.constant 2 : i32
    %28 = vector.broadcast %c2_i32_1 : i32 to vector<8x256xi32>
    %29 = arith.muli %8, %28 : vector<8x256xi32>
    %c1_i32 = arith.constant 1 : i32
    %30 = vector.broadcast %c1_i32 : i32 to vector<8x256xi32>
    %31 = arith.addi %29, %30 : vector<8x256xi32>
    %32 = vector.broadcast %10 : i32 to vector<8x256xi32>
    %33 = arith.addi %31, %32 : vector<8x256xi32>
    %c16_i32_2 = arith.constant 16 : i32
    %34 = vector.broadcast %c16_i32_2 : i32 to vector<8x256xi32>
    %35 = arith.shrui %33, %34 : vector<8x256xi32>
    %36 = arith.xori %33, %35 : vector<8x256xi32>
    %c2146121005_i32_3 = arith.constant 2146121005 : i32
    %37 = vector.broadcast %c2146121005_i32_3 : i32 to vector<8x256xi32>
    %38 = arith.muli %36, %37 : vector<8x256xi32>
    %c15_i32_4 = arith.constant 15 : i32
    %39 = vector.broadcast %c15_i32_4 : i32 to vector<8x256xi32>
    %40 = arith.shrui %38, %39 : vector<8x256xi32>
    %41 = arith.xori %38, %40 : vector<8x256xi32>
    %c-2073254261_i32_5 = arith.constant -2073254261 : i32
    %42 = vector.broadcast %c-2073254261_i32_5 : i32 to vector<8x256xi32>
    %43 = arith.muli %41, %42 : vector<8x256xi32>
    %c16_i32_6 = arith.constant 16 : i32
    %44 = vector.broadcast %c16_i32_6 : i32 to vector<8x256xi32>
    %45 = arith.shrui %43, %44 : vector<8x256xi32>
    %46 = arith.xori %43, %45 : vector<8x256xi32>
    %c9_i32 = arith.constant 9 : i32
    %47 = vector.broadcast %c9_i32 : i32 to vector<8x256xi32>
    %48 = arith.shrui %27, %47 : vector<8x256xi32>
    %c1065353216_i32 = arith.constant 1065353216 : i32
    %49 = vector.broadcast %c1065353216_i32 : i32 to vector<8x256xi32>
    %50 = arith.ori %48, %49 : vector<8x256xi32>
    %51 = tpu.bitcast %50 : vector<8x256xi32> -> vector<8x256xf32>
    %cst = arith.constant 2.000000e+00 : f32
    %52 = vector.broadcast %cst : f32 to vector<8x256xf32>
    %53 = arith.subf %52, %51 : vector<8x256xf32>
    %c9_i32_7 = arith.constant 9 : i32
    %54 = vector.broadcast %c9_i32_7 : i32 to vector<8x256xi32>
    %55 = arith.shrui %46, %54 : vector<8x256xi32>
    %c1065353216_i32_8 = arith.constant 1065353216 : i32
    %56 = vector.broadcast %c1065353216_i32_8 : i32 to vector<8x256xi32>
    %57 = arith.ori %55, %56 : vector<8x256xi32>
    %58 = tpu.bitcast %57 : vector<8x256xi32> -> vector<8x256xf32>
    %cst_9 = arith.constant 1.000000e+00 : f32
    %59 = vector.broadcast %cst_9 : f32 to vector<8x256xf32>
    %60 = arith.subf %58, %59 : vector<8x256xf32>
    %61 = math.log %53 : vector<8x256xf32>
    %cst_10 = arith.constant -2.000000e+00 : f32
    %62 = vector.broadcast %cst_10 : f32 to vector<8x256xf32>
    %63 = arith.mulf %62, %61 : vector<8x256xf32>
    %64 = math.sqrt %63 : vector<8x256xf32>
    %cst_11 = arith.constant 6.28318548 : f32
    %65 = vector.broadcast %cst_11 : f32 to vector<8x256xf32>
    %66 = arith.mulf %65, %60 : vector<8x256xf32>
    %67 = math.cos %66 : vector<8x256xf32>
    %68 = arith.mulf %64, %67 : vector<8x256xf32>
    %69 = math.sin %66 : vector<8x256xf32>
    %70 = arith.mulf %64, %69 : vector<8x256xf32>
    %c0_12 = arith.constant 0 : index
    %c0_13 = arith.constant 0 : index
    %71 = vector.load %arg2[%c0_12, %c0_13] : memref<16x256xf32, #tpu.memory_space<vmem>>, vector<8x256xf32>
    tpu.vector_store %arg2[%c0_12, %c0_13], %68 {strides = array<i32>} : memref<16x256xf32, #tpu.memory_space<vmem>>, vector<8x256xf32>,
    %c8 = arith.constant 8 : index
    %c0_14 = arith.constant 0 : index
    %72 = vector.load %arg2[%c8, %c0_14] : memref<16x256xf32, #tpu.memory_space<vmem>>, vector<8x256xf32>
    tpu.vector_store %arg2[%c8, %c0_14], %70 {strides = array<i32>} : memref<16x256xf32, #tpu.memory_space<vmem>>, vector<8x256xf32>,
    return
  }
  func.func @transform_0(%arg0: i32) -> i32 {
    %c0_i32 = arith.constant 0 : i32
    %c0_i32_0 = arith.constant 0 : i32
    return %c0_i32 : i32
  }
  func.func @transform_1(%arg0: i32) -> (i32, i32) {
    %c0_i32 = arith.constant 0 : i32
    %c0_i32_0 = arith.constant 0 : i32
    return %arg0, %c0_i32 : i32, i32
  }
}

</mosaic_0001>

<llo_original>
// kernel: tpu_custom_call.1
$region0: #{tpu_custom_call.1}
  #allocation0 [shape = 'u32[]', space=smem, size = 0x4, offset = 0x4, fixed_abs, tag = 'smem constant byte address 0x4 - core index']
  #allocation1 [shape = 'u32[72,128]{1,0:T(1,128)}', space=vmem, size = 0x9000, scoped, tag = 'internal scratch']
  #allocation2 [shape = 'u32[1]{0:T(128)S(6)}', space=smem, size = 0x200, scoped, tag = 'scoped memory for tpu_custom_call.1']
  %s0 = inlined_call_operand.<no memory space> [shape: u32[1], index: 0, kind: input, shape index: {}]
  %s1 = inlined_call_operand.hbm [shape: f32[16,256], index: 1, kind: output, shape index: {}]
  %s2 = sld [smem:[#allocation0]]
  $region14: #{tpu_custom_call.1} parent=0
    _
  %s4 = ssub.s32 1, %s2
  %s5 = scalar_select 0, %s4, %s2
  %6 = sst [smem:[#allocation2]] %s0
  $region1: #{tpu_custom_call.1} parent=0
    #allocation3 [shape = 'u8[16384]{0}', space=vmem, size = 0x4000, scoped, tag = 'output window, operand 0, single buffered']
    #allocation4 [shape = 's32[1]{0}', space=sflag, size = 0x4, scoped, tag = 'scoped memory for tpu_custom_call.1']
    %7 = vsyncpa [#allocation4], 0
    // Predicated region
    $region2: #{tpu_custom_call.1} parent=1 // pred_check
      _
    $region3: #{tpu_custom_call.1} parent=1 // pred_check_branch
      %9 = sbr.rel (0) target = $region5
    $region4: #{tpu_custom_call.1} parent=1 // pred_region
      _
    $region5: #{tpu_custom_call.1} parent=1 // pred_fallthru
      _
    %v10 = vlaneseq
    %v11 = vshrl.u32 %v10, 7
    %v12 = vlaneseq
    %v13 = vand.u32 %v12, 127
    %v14 = vadd.s32 %v13, 128
    %s15 = smul.u32 0, 8
    %v16 = vstv %s15
    %v17 = vadd.s32 %v11, %v16
    %v18 = vmul.u32 %v17, 256
    %v19 = vadd.s32 %v18, %v13
    %v20 = vadd.s32 %v18, %v14
    %s21 = sld [smem:[#allocation2]]
    %s22 = smul.u32 %s21, 2654435761
    %v23 = vmul.u32 %v19, 2
    %v24 = vmul.u32 %v20, 2
    %v25 = vstv %s22
    %v26 = vadd.s32 %v23, %v25
    %v27 = vadd.s32 %v24, %v25
    %v28 = vshrl.u32 %v26, 16
    %v29 = vshrl.u32 %v27, 16
    %v30 = vxor.u32 %v26, %v28
    %v31 = vxor.u32 %v27, %v29
    %v32 = vmul.u32 %v30, 2146121005
    %v33 = vmul.u32 %v31, 2146121005
    %v34 = vshrl.u32 %v32, 15
    %v35 = vshrl.u32 %v33, 15
    %v36 = vxor.u32 %v32, %v34
    %v37 = vxor.u32 %v33, %v35
    %v38 = vmul.u32 %v36, 2221713035
    %v39 = vmul.u32 %v37, 2221713035
    %v40 = vshrl.u32 %v38, 16
    %v41 = vshrl.u32 %v39, 16
    %v42 = vxor.u32 %v38, %v40
    %v43 = vxor.u32 %v39, %v41
    %v44 = vadd.s32 %v23, 1
    %v45 = vadd.s32 %v24, 1
    %v46 = vadd.s32 %v44, %v25
    %v47 = vadd.s32 %v45, %v25
    %v48 = vshrl.u32 %v46, 16
    %v49 = vshrl.u32 %v47, 16
    %v50 = vxor.u32 %v46, %v48
    %v51 = vxor.u32 %v47, %v49
    %v52 = vmul.u32 %v50, 2146121005
    %v53 = vmul.u32 %v51, 2146121005
    %v54 = vshrl.u32 %v52, 15
    %v55 = vshrl.u32 %v53, 15
    %v56 = vxor.u32 %v52, %v54
    %v57 = vxor.u32 %v53, %v55
    %v58 = vmul.u32 %v56, 2221713035
    %v59 = vmul.u32 %v57, 2221713035
    %v60 = vshrl.u32 %v58, 16
    %v61 = vshrl.u32 %v59, 16
    %v62 = vxor.u32 %v58, %v60
    %v63 = vxor.u32 %v59, %v61
    %v64 = vshrl.u32 %v42, 9
    %v65 = vshrl.u32 %v43, 9
    %v66 = vor.u32 %v64, 1065353216
    %v67 = vor.u32 %v65, 1065353216
    %v70 = vsub.f32 2.0, %v66
    %v71 = vsub.f32 2.0, %v67
    %v72 = vshrl.u32 %v62, 9
    %v73 = vshrl.u32 %v63, 9
    %v74 = vor.u32 %v72, 1065353216
    %v75 = vor.u32 %v73, 1065353216
    %v78 = vsub.f32 %v74, 1.0
    %v79 = vsub.f32 %v75, 1.0
    %v80 = vlog2.pop %v70
    %v81 = vmul.f32 %v80, 0.6931472
    %v82 = vlog2.pop %v71
    %v83 = vmul.f32 %v82, 0.6931472
    %v84 = vmul.f32 %v81, -2.0
    %v85 = vmul.f32 %v83, -2.0
    %v86 = vrsqrt.pop %v84
    %v87 = vmul.f32 %v86, %v84
    %v88 = vmul.f32 %v87, %v86
    %v89 = vmul.f32 0.5, %v88
    %v90 = vsub.f32 1.5, %v89
    %v91 = vmul.f32 %v86, %v90
    %v92 = vmul.f32 %v84, %v91
    %vm93 = vcmp.eq.f32.partialorder %v84, inf
    %v94 = vsel %vm93, %v84, %v92
    %vm95 = vcmp.eq.f32.partialorder %v84, 0.0
    %v96 = vand.u32 %v84, 2147483648
    %v97 = vsel %vm95, %v96, %v94
    %v98 = vrsqrt.pop %v85
    %v99 = vmul.f32 %v98, %v85
    %v100 = vmul.f32 %v99, %v98
    %v101 = vmul.f32 0.5, %v100
    %v102 = vsub.f32 1.5, %v101
    %v103 = vmul.f32 %v98, %v102
    %v104 = vmul.f32 %v85, %v103
    %vm105 = vcmp.eq.f32.partialorder %v85, inf
    %v106 = vsel %vm105, %v85, %v104
    %vm107 = vcmp.eq.f32.partialorder %v85, 0.0
    %v108 = vand.u32 %v85, 2147483648
    %v109 = vsel %vm107, %v108, %v106
    %v110 = vmul.f32 %v78, 6.2831855
    %v111 = vmul.f32 %v79, 6.2831855
    %v112 = vand.u32 2147483647, %v110
    %vm113 = vcmp.le.f32.partialorder %v112, 0.7853982
    %vm114 = vcmp.lt.s32.totalorder %v110, 0
    %v115 = vand.u32 %v110, 2139095040
    %v116 = vshrl.u32 %v115, 23
    %v117 = vsub.s32 %v116, 127
    %v118 = vand.u32 2147483647, %v110
    %v119 = vand.u32 %v118, 8388607
    %v120 = vor.u32 %v119, 8388608
    %v121 = vsub.s32 0, %v120
    %v122 = vadd.s32 %v117, 1
    %vm123 = vcmp.gt.s32.totalorder %v122, 0
    %v124 = vsel %vm123, %v122, 0
    %v125 = vshrl.u32 %v124, 5
    %v126 = vand.u32 %v124, 31
    %v127 = vsub.s32 32, %v126
    %v128 = vshrl.u32 683565275, %v127
    %v129 = vshll.u32 683565275, %v126
    %v130 = vshrl.u32 2475754826, %v127
    %v131 = vor.u32 %v129, %v130
    %v132 = vshll.u32 2475754826, %v126
    %v133 = vshrl.u32 2131351028, %v127
    %v134 = vor.u32 %v132, %v133
    %v135 = vshll.u32 2131351028, %v126
    %v136 = vshrl.u32 2102212464, %v127
    %v137 = vor.u32 %v135, %v136
    %v138 = vshll.u32 2102212464, %v126
    %v139 = vshrl.u32 920167782, %v127
    %v140 = vor.u32 %v138, %v139
    %v141 = vshll.u32 920167782, %v126
    %v142 = vshrl.u32 1326507024, %v127
    %v143 = vor.u32 %v141, %v142
    %vm144 = vcmp.lt.s32.totalorder %v125, 1
    %vm145 = vcmp.lt.s32.totalorder %v125, 2
    %vm146 = vcmp.lt.s32.totalorder %v125, 3
    %vm147 = vcmp.lt.s32.totalorder %v125, 4
    %v148 = vsel %vm144, %v128, %v131
    %v149 = vsel %vm147, %v137, 2102212464
    %v150 = vsel %vm146, %v134, %v149
    %v151 = vsel %vm145, %v148, %v150
    %v152 = vsel %vm144, %v131, %v134
    %v153 = vsel %vm147, %v140, 920167782
    %v154 = vsel %vm146, %v137, %v153
    %v155 = vsel %vm145, %v152, %v154
    %v156 = vsel %vm144, %v134, %v137
    %v157 = vsel %vm147, %v143, 1326507024
    %v158 = vsel %vm146, %v140, %v157
    %v159 = vsel %vm145, %v156, %v158
    %v160 = vshll.u32 %v120, 8
    %v161 = vand.u32 %v160, 65535
    %v162 = vshrl.u32 %v160, 16
    %v163 = vand.u32 %v159, 65535
    %v164 = vshrl.u32 %v159, 16
    %v165 = vmul.u32 %v161, %v163
    %v166 = vmul.u32 %v161, %v164
    %v167 = vmul.u32 %v162, %v163
    %v168 = vmul.u32 %v162, %v164
    %v169 = vshll.u32 %v166, 16
    %v170 = vshrl.u32 %v166, 16
    %v171 = vshll.u32 %v167, 16
    %v172 = vshrl.u32 %v167, 16
    %vm173 = vc.u32 %v165, %v169
    %v174 = vsel %vm173, 1, 0
    %v175 = vadd.s32 %v165, %v169
    %v176 = vadd.s32 %v168, %v174
    %vm177 = vc.u32 %v175, %v171
    %v178 = vsel %vm177, 1, 0
    %v179 = vadd.s32 %v175, %v171
    %v180 = vadd.s32 %v176, %v178
    %v181 = vadd.s32 %v180, %v170
    %v182 = vadd.s32 %v181, %v172
    %v183 = vand.u32 %v160, 65535
    %v184 = vshrl.u32 %v160, 16
    %v185 = vand.u32 %v155, 65535
    %v186 = vshrl.u32 %v155, 16
    %v187 = vmul.u32 %v183, %v185
    %v188 = vmul.u32 %v183, %v186
    %v189 = vmul.u32 %v184, %v185
    %v190 = vmul.u32 %v184, %v186
    %v191 = vshll.u32 %v188, 16
    %v192 = vshrl.u32 %v188, 16
    %v193 = vshll.u32 %v189, 16
    %v194 = vshrl.u32 %v189, 16
    %vm195 = vc.u32 %v187, %v191
    %v196 = vsel %vm195, 1, 0
    %v197 = vadd.s32 %v187, %v191
    %v198 = vadd.s32 %v190, %v196
    %vm199 = vc.u32 %v197, %v193
    %v200 = vsel %vm199, 1, 0
    %v201 = vadd.s32 %v197, %v193
    %v202 = vadd.s32 %v198, %v200
    %v203 = vadd.s32 %v202, %v192
    %v204 = vadd.s32 %v203, %v194
    %v205 = vmul.u32 %v160, %v151
    %v206 = vadd.s32 %v182, %v201
    %vm207 = vc.u32 %v182, %v201
    %v208 = vadd.s32 %v204, 1
    %v209 = vsel %vm207, %v208, %v204
    %v210 = vadd.s32 %v205, %v209
    %v211 = vadd.s32 %v210, 536870912
    %v212 = vshrl.u32 %v211, 30
    %v213 = vshll.u32 %v212, 30
    %v214 = vsub.s32 %v210, %v213
    %vm215 = vcmp.lt.s32.totalorder %v214, 0
    %v216 = vsub.s32 0, %v214
    %v217 = vsel %vm215, %v216, %v214
    %v218 = vclz %v217
    %v219 = vsub.s32 %v218, 2
    %vm220 = vcmp.gt.s32.totalorder 0, %v219
    %v221 = vsel %vm220, 0, %v219
    %v222 = vsub.s32 32, %v221
    %v223 = vshll.u32 %v214, %v221
    %v224 = vshrl.u32 %v206, %v222
    %v225 = vor.u32 %v223, %v224
    %v226 = vsub.s32 4294967266, %v221
    %v227 = vadd.s32 %v226, 127
    %v228 = vshll.u32 %v227, 23
    %v229 = vor.u32 4788187, %v228
    %v230 = vand.u32 2147483647, %v229
    %v232 = vcvt.s32.f32 %v225
    %v233 = vmul.f32 %v232, %v230
    %v234 = vxor.u32 %v233, 2147483648
    %v235 = vsel %vm114, %v234, %v233
    %v236 = vsub.s32 4, %v212
    %v237 = vsel %vm114, %v236, %v212
    %v238 = vsel %vm113, %v110, %v235
    %v239 = vsel %vm113, 0, %v237
    %v240 = vmul.f32 %v238, %v238
    %v241 = vmul.f32 %v240, -0.001358992
    %v242 = vadd.f32 %v241, 0.041655596
    %v243 = vmul.f32 %v240, %v242
    %v244 = vadd.f32 %v243, -0.4999988
    %v245 = vmul.f32 %v240, %v244
    %v246 = vadd.f32 1.0, %v245
    %v247 = vmul.f32 %v238, %v238
    %v248 = vmul.f32 %v247, -0.00019511016
    %v249 = vadd.f32 %v248, 0.008332121
    %v250 = vmul.f32 %v247, %v249
    %v251 = vadd.f32 %v250, -0.16666654
    %v252 = vmul.f32 %v247, %v251
    %v253 = vadd.f32 %v252, 1.0
    %v254 = vmul.f32 %v253, %v238
    %vm255 = vweird.f32 %v110
    %v256 = vand.u32 %v239, 3
    %vm257 = vcmp.lt.s32.totalorder %v256, 2
    %vm258 = vcmp.eq.s32.totalorder %v256, 0
    %v259 = vxor.u32 %v254, 2147483648
    %v260 = vsel %vm258, %v246, %v259
    %vm261 = vcmp.eq.s32.totalorder %v256, 2
    %v262 = vxor.u32 %v246, 2147483648
    %v263 = vsel %vm261, %v262, %v254
    %v264 = vsel %vm257, %v260, %v263
    %v265 = vsel %vm255, nan, %v264
    %v266 = vand.u32 2147483647, %v111
    %vm267 = vcmp.le.f32.partialorder %v266, 0.7853982
    %vm268 = vcmp.lt.s32.totalorder %v111, 0
    %v269 = vand.u32 %v111, 2139095040
    %v270 = vshrl.u32 %v269, 23
    %v271 = vsub.s32 %v270, 127
    %v272 = vand.u32 2147483647, %v111
    %v273 = vand.u32 %v272, 8388607
    %v274 = vor.u32 %v273, 8388608
    %v275 = vsub.s32 0, %v274
    %v276 = vadd.s32 %v271, 1
    %vm277 = vcmp.gt.s32.totalorder %v276, 0
    %v278 = vsel %vm277, %v276, 0
    %v279 = vshrl.u32 %v278, 5
    %v280 = vand.u32 %v278, 31
    %v281 = vsub.s32 32, %v280
    %v282 = vshrl.u32 683565275, %v281
    %v283 = vshll.u32 683565275, %v280
    %v284 = vshrl.u32 2475754826, %v281
    %v285 = vor.u32 %v283, %v284
    %v286 = vshll.u32 2475754826, %v280
    %v287 = vshrl.u32 2131351028, %v281
    %v288 = vor.u32 %v286, %v287
    %v289 = vshll.u32 2131351028, %v280
    %v290 = vshrl.u32 2102212464, %v281
    %v291 = vor.u32 %v289, %v290
    %v292 = vshll.u32 2102212464, %v280
    %v293 = vshrl.u32 920167782, %v281
    %v294 = vor.u32 %v292, %v293
    %v295 = vshll.u32 920167782, %v280
    %v296 = vshrl.u32 1326507024, %v281
    %v297 = vor.u32 %v295, %v296
    %vm298 = vcmp.lt.s32.totalorder %v279, 1
    %vm299 = vcmp.lt.s32.totalorder %v279, 2
    %vm300 = vcmp.lt.s32.totalorder %v279, 3
    %vm301 = vcmp.lt.s32.totalorder %v279, 4
    %v302 = vsel %vm298, %v282, %v285
    %v303 = vsel %vm301, %v291, 2102212464
    %v304 = vsel %vm300, %v288, %v303
    %v305 = vsel %vm299, %v302, %v304
    %v306 = vsel %vm298, %v285, %v288
    %v307 = vsel %vm301, %v294, 920167782
    %v308 = vsel %vm300, %v291, %v307
    %v309 = vsel %vm299, %v306, %v308
    %v310 = vsel %vm298, %v288, %v291
    %v311 = vsel %vm301, %v297, 1326507024
    %v312 = vsel %vm300, %v294, %v311
    %v313 = vsel %vm299, %v310, %v312
    %v314 = vshll.u32 %v274, 8
    %v315 = vand.u32 %v314, 65535
    %v316 = vshrl.u32 %v314, 16
    %v317 = vand.u32 %v313, 65535
    %v318 = vshrl.u32 %v313, 16
    %v319 = vmul.u32 %v315, %v317
    %v320 = vmul.u32 %v315, %v318
    %v321 = vmul.u32 %v316, %v317
    %v322 = vmul.u32 %v316, %v318
    %v323 = vshll.u32 %v320, 16
    %v324 = vshrl.u32 %v320, 16
    %v325 = vshll.u32 %v321, 16
    %v326 = vshrl.u32 %v321, 16
    %vm327 = vc.u32 %v319, %v323
    %v328 = vsel %vm327, 1, 0
    %v329 = vadd.s32 %v319, %v323
    %v330 = vadd.s32 %v322, %v328
    %vm331 = vc.u32 %v329, %v325
    %v332 = vsel %vm331, 1, 0
    %v333 = vadd.s32 %v329, %v325
    %v334 = vadd.s32 %v330, %v332
    %v335 = vadd.s32 %v334, %v324
    %v336 = vadd.s32 %v335, %v326
    %v337 = vand.u32 %v314, 65535
    %v338 = vshrl.u32 %v314, 16
    %v339 = vand.u32 %v309, 65535
    %v340 = vshrl.u32 %v309, 16
    %v341 = vmul.u32 %v337, %v339
    %v342 = vmul.u32 %v337, %v340
    %v343 = vmul.u32 %v338, %v339
    %v344 = vmul.u32 %v338, %v340
    %v345 = vshll.u32 %v342, 16
    %v346 = vshrl.u32 %v342, 16
    %v347 = vshll.u32 %v343, 16
    %v348 = vshrl.u32 %v343, 16
    %vm349 = vc.u32 %v341, %v345
    %v350 = vsel %vm349, 1, 0
    %v351 = vadd.s32 %v341, %v345
    %v352 = vadd.s32 %v344, %v350
    %vm353 = vc.u32 %v351, %v347
    %v354 = vsel %vm353, 1, 0
    %v355 = vadd.s32 %v351, %v347
    %v356 = vadd.s32 %v352, %v354
    %v357 = vadd.s32 %v356, %v346
    %v358 = vadd.s32 %v357, %v348
    %v359 = vmul.u32 %v314, %v305
    %v360 = vadd.s32 %v336, %v355
    %vm361 = vc.u32 %v336, %v355
    %v362 = vadd.s32 %v358, 1
    %v363 = vsel %vm361, %v362, %v358
    %v364 = vadd.s32 %v359, %v363
    %v365 = vadd.s32 %v364, 536870912
    %v366 = vshrl.u32 %v365, 30
    %v367 = vshll.u32 %v366, 30
    %v368 = vsub.s32 %v364, %v367
    %vm369 = vcmp.lt.s32.totalorder %v368, 0
    %v370 = vsub.s32 0, %v368
    %v371 = vsel %vm369, %v370, %v368
    %v372 = vclz %v371
    %v373 = vsub.s32 %v372, 2
    %vm374 = vcmp.gt.s32.totalorder 0, %v373
    %v375 = vsel %vm374, 0, %v373
    %v376 = vsub.s32 32, %v375
    %v377 = vshll.u32 %v368, %v375
    %v378 = vshrl.u32 %v360, %v376
    %v379 = vor.u32 %v377, %v378
    %v380 = vsub.s32 4294967266, %v375
    %v381 = vadd.s32 %v380, 127
    %v382 = vshll.u32 %v381, 23
    %v383 = vor.u32 4788187, %v382
    %v384 = vand.u32 2147483647, %v383
    %v386 = vcvt.s32.f32 %v379
    %v387 = vmul.f32 %v386, %v384
    %v388 = vxor.u32 %v387, 2147483648
    %v389 = vsel %vm268, %v388, %v387
    %v390 = vsub.s32 4, %v366
    %v391 = vsel %vm268, %v390, %v366
    %v392 = vsel %vm267, %v111, %v389
    %v393 = vsel %vm267, 0, %v391
    %v394 = vmul.f32 %v392, %v392
    %v395 = vmul.f32 %v394, -0.001358992
    %v396 = vadd.f32 %v395, 0.041655596
    %v397 = vmul.f32 %v394, %v396
    %v398 = vadd.f32 %v397, -0.4999988
    %v399 = vmul.f32 %v394, %v398
    %v400 = vadd.f32 1.0, %v399
    %v401 = vmul.f32 %v392, %v392
    %v402 = vmul.f32 %v401, -0.00019511016
    %v403 = vadd.f32 %v402, 0.008332121
    %v404 = vmul.f32 %v401, %v403
    %v405 = vadd.f32 %v404, -0.16666654
    %v406 = vmul.f32 %v401, %v405
    %v407 = vadd.f32 %v406, 1.0
    %v408 = vmul.f32 %v407, %v392
    %vm409 = vweird.f32 %v111
    %v410 = vand.u32 %v393, 3
    %vm411 = vcmp.lt.s32.totalorder %v410, 2
    %vm412 = vcmp.eq.s32.totalorder %v410, 0
    %v413 = vxor.u32 %v408, 2147483648
    %v414 = vsel %vm412, %v400, %v413
    %vm415 = vcmp.eq.s32.totalorder %v410, 2
    %v416 = vxor.u32 %v400, 2147483648
    %v417 = vsel %vm415, %v416, %v408
    %v418 = vsel %vm411, %v414, %v417
    %v419 = vsel %vm409, nan, %v418
    %v420 = vmul.f32 %v97, %v265
    %v421 = vmul.f32 %v109, %v419
    %v422 = vand.u32 2147483647, %v110
    %vm423 = vcmp.le.f32.partialorder %v422, 0.7853982
    %vm424 = vcmp.lt.s32.totalorder %v110, 0
    %v425 = vand.u32 %v110, 2139095040
    %v426 = vshrl.u32 %v425, 23
    %v427 = vsub.s32 %v426, 127
    %v428 = vand.u32 2147483647, %v110
    %v429 = vand.u32 %v428, 8388607
    %v430 = vor.u32 %v429, 8388608
    %v431 = vsub.s32 0, %v430
    %v432 = vadd.s32 %v427, 1
    %vm433 = vcmp.gt.s32.totalorder %v432, 0
    %v434 = vsel %vm433, %v432, 0
    %v435 = vshrl.u32 %v434, 5
    %v436 = vand.u32 %v434, 31
    %v437 = vsub.s32 32, %v436
    %v438 = vshrl.u32 683565275, %v437
    %v439 = vshll.u32 683565275, %v436
    %v440 = vshrl.u32 2475754826, %v437
    %v441 = vor.u32 %v439, %v440
    %v442 = vshll.u32 2475754826, %v436
    %v443 = vshrl.u32 2131351028, %v437
    %v444 = vor.u32 %v442, %v443
    %v445 = vshll.u32 2131351028, %v436
    %v446 = vshrl.u32 2102212464, %v437
    %v447 = vor.u32 %v445, %v446
    %v448 = vshll.u32 2102212464, %v436
    %v449 = vshrl.u32 920167782, %v437
    %v450 = vor.u32 %v448, %v449
    %v451 = vshll.u32 920167782, %v436
    %v452 = vshrl.u32 1326507024, %v437
    %v453 = vor.u32 %v451, %v452
    %vm454 = vcmp.lt.s32.totalorder %v435, 1
    %vm455 = vcmp.lt.s32.totalorder %v435, 2
    %vm456 = vcmp.lt.s32.totalorder %v435, 3
    %vm457 = vcmp.lt.s32.totalorder %v435, 4
    %v458 = vsel %vm454, %v438, %v441
    %v459 = vsel %vm457, %v447, 2102212464
    %v460 = vsel %vm456, %v444, %v459
    %v461 = vsel %vm455, %v458, %v460
    %v462 = vsel %vm454, %v441, %v444
    %v463 = vsel %vm457, %v450, 920167782
    %v464 = vsel %vm456, %v447, %v463
    %v465 = vsel %vm455, %v462, %v464
    %v466 = vsel %vm454, %v444, %v447
    %v467 = vsel %vm457, %v453, 1326507024
    %v468 = vsel %vm456, %v450, %v467
    %v469 = vsel %vm455, %v466, %v468
    %v470 = vshll.u32 %v430, 8
    %v471 = vand.u32 %v470, 65535
    %v472 = vshrl.u32 %v470, 16
    %v473 = vand.u32 %v469, 65535
    %v474 = vshrl.u32 %v469, 16
    %v475 = vmul.u32 %v471, %v473
    %v476 = vmul.u32 %v471, %v474
    %v477 = vmul.u32 %v472, %v473
    %v478 = vmul.u32 %v472, %v474
    %v479 = vshll.u32 %v476, 16
    %v480 = vshrl.u32 %v476, 16
    %v481 = vshll.u32 %v477, 16
    %v482 = vshrl.u32 %v477, 16
    %vm483 = vc.u32 %v475, %v479
    %v484 = vsel %vm483, 1, 0
    %v485 = vadd.s32 %v475, %v479
    %v486 = vadd.s32 %v478, %v484
    %vm487 = vc.u32 %v485, %v481
    %v488 = vsel %vm487, 1, 0
    %v489 = vadd.s32 %v485, %v481
    %v490 = vadd.s32 %v486, %v488
    %v491 = vadd.s32 %v490, %v480
    %v492 = vadd.s32 %v491, %v482
    %v493 = vand.u32 %v470, 65535
    %v494 = vshrl.u32 %v470, 16
    %v495 = vand.u32 %v465, 65535
    %v496 = vshrl.u32 %v465, 16
    %v497 = vmul.u32 %v493, %v495
    %v498 = vmul.u32 %v493, %v496
    %v499 = vmul.u32 %v494, %v495
    %v500 = vmul.u32 %v494, %v496
    %v501 = vshll.u32 %v498, 16
    %v502 = vshrl.u32 %v498, 16
    %v503 = vshll.u32 %v499, 16
    %v504 = vshrl.u32 %v499, 16
    %vm505 = vc.u32 %v497, %v501
    %v506 = vsel %vm505, 1, 0
    %v507 = vadd.s32 %v497, %v501
    %v508 = vadd.s32 %v500, %v506
    %vm509 = vc.u32 %v507, %v503
    %v510 = vsel %vm509, 1, 0
    %v511 = vadd.s32 %v507, %v503
    %v512 = vadd.s32 %v508, %v510
    %v513 = vadd.s32 %v512, %v502
    %v514 = vadd.s32 %v513, %v504
    %v515 = vmul.u32 %v470, %v461
    %v516 = vadd.s32 %v492, %v511
    %vm517 = vc.u32 %v492, %v511
    %v518 = vadd.s32 %v514, 1
    %v519 = vsel %vm517, %v518, %v514
    %v520 = vadd.s32 %v515, %v519
    %v521 = vadd.s32 %v520, 536870912
    %v522 = vshrl.u32 %v521, 30
    %v523 = vshll.u32 %v522, 30
    %v524 = vsub.s32 %v520, %v523
    %vm525 = vcmp.lt.s32.totalorder %v524, 0
    %v526 = vsub.s32 0, %v524
    %v527 = vsel %vm525, %v526, %v524
    %v528 = vclz %v527
    %v529 = vsub.s32 %v528, 2
    %vm530 = vcmp.gt.s32.totalorder 0, %v529
    %v531 = vsel %vm530, 0, %v529
    %v532 = vsub.s32 32, %v531
    %v533 = vshll.u32 %v524, %v531
    %v534 = vshrl.u32 %v516, %v532
    %v535 = vor.u32 %v533, %v534
    %v536 = vsub.s32 4294967266, %v531
    %v537 = vadd.s32 %v536, 127
    %v538 = vshll.u32 %v537, 23
    %v539 = vor.u32 4788187, %v538
    %v540 = vand.u32 2147483647, %v539
    %v542 = vcvt.s32.f32 %v535
    %v543 = vmul.f32 %v542, %v540
    %v544 = vxor.u32 %v543, 2147483648
    %v545 = vsel %vm424, %v544, %v543
    %v546 = vsub.s32 4, %v522
    %v547 = vsel %vm424, %v546, %v522
    %v548 = vsel %vm423, %v110, %v545
    %v549 = vsel %vm423, 0, %v547
    %v550 = vmul.f32 %v548, %v548
    %v551 = vmul.f32 %v550, -0.001358992
    %v552 = vadd.f32 %v551, 0.041655596
    %v553 = vmul.f32 %v550, %v552
    %v554 = vadd.f32 %v553, -0.4999988
    %v555 = vmul.f32 %v550, %v554
    %v556 = vadd.f32 1.0, %v555
    %v557 = vmul.f32 %v548, %v548
    %v558 = vmul.f32 %v557, -0.00019511016
    %v559 = vadd.f32 %v558, 0.008332121
    %v560 = vmul.f32 %v557, %v559
    %v561 = vadd.f32 %v560, -0.16666654
    %v562 = vmul.f32 %v557, %v561
    %v563 = vadd.f32 %v562, 1.0
    %v564 = vmul.f32 %v563, %v548
    %vm565 = vweird.f32 %v110
    %v566 = vadd.s32 %v549, 3
    %v567 = vand.u32 %v566, 3
    %vm568 = vcmp.lt.s32.totalorder %v567, 2
    %vm569 = vcmp.eq.s32.totalorder %v567, 0
    %v570 = vxor.u32 %v564, 2147483648
    %v571 = vsel %vm569, %v556, %v570
    %vm572 = vcmp.eq.s32.totalorder %v567, 2
    %v573 = vxor.u32 %v556, 2147483648
    %v574 = vsel %vm572, %v573, %v564
    %v575 = vsel %vm568, %v571, %v574
    %v576 = vsel %vm565, nan, %v575
    %v577 = vand.u32 2147483647, %v111
    %vm578 = vcmp.le.f32.partialorder %v577, 0.7853982
    %vm579 = vcmp.lt.s32.totalorder %v111, 0
    %v580 = vand.u32 %v111, 2139095040
    %v581 = vshrl.u32 %v580, 23
    %v582 = vsub.s32 %v581, 127
    %v583 = vand.u32 2147483647, %v111
    %v584 = vand.u32 %v583, 8388607
    %v585 = vor.u32 %v584, 8388608
    %v586 = vsub.s32 0, %v585
    %v587 = vadd.s32 %v582, 1
    %vm588 = vcmp.gt.s32.totalorder %v587, 0
    %v589 = vsel %vm588, %v587, 0
    %v590 = vshrl.u32 %v589, 5
    %v591 = vand.u32 %v589, 31
    %v592 = vsub.s32 32, %v591
    %v593 = vshrl.u32 683565275, %v592
    %v594 = vshll.u32 683565275, %v591
    %v595 = vshrl.u32 2475754826, %v592
    %v596 = vor.u32 %v594, %v595
    %v597 = vshll.u32 2475754826, %v591
    %v598 = vshrl.u32 2131351028, %v592
    %v599 = vor.u32 %v597, %v598
    %v600 = vshll.u32 2131351028, %v591
    %v601 = vshrl.u32 2102212464, %v592
    %v602 = vor.u32 %v600, %v601
    %v603 = vshll.u32 2102212464, %v591
    %v604 = vshrl.u32 920167782, %v592
    %v605 = vor.u32 %v603, %v604
    %v606 = vshll.u32 920167782, %v591
    %v607 = vshrl.u32 1326507024, %v592
    %v608 = vor.u32 %v606, %v607
    %vm609 = vcmp.lt.s32.totalorder %v590, 1
    %vm610 = vcmp.lt.s32.totalorder %v590, 2
    %vm611 = vcmp.lt.s32.totalorder %v590, 3
    %vm612 = vcmp.lt.s32.totalorder %v590, 4
    %v613 = vsel %vm609, %v593, %v596
    %v614 = vsel %vm612, %v602, 2102212464
    %v615 = vsel %vm611, %v599, %v614
    %v616 = vsel %vm610, %v613, %v615
    %v617 = vsel %vm609, %v596, %v599
    %v618 = vsel %vm612, %v605, 920167782
    %v619 = vsel %vm611, %v602, %v618
    %v620 = vsel %vm610, %v617, %v619
    %v621 = vsel %vm609, %v599, %v602
    %v622 = vsel %vm612, %v608, 1326507024
    %v623 = vsel %vm611, %v605, %v622
    %v624 = vsel %vm610, %v621, %v623
    %v625 = vshll.u32 %v585, 8
    %v626 = vand.u32 %v625, 65535
    %v627 = vshrl.u32 %v625, 16
    %v628 = vand.u32 %v624, 65535
    %v629 = vshrl.u32 %v624, 16
    %v630 = vmul.u32 %v626, %v628
    %v631 = vmul.u32 %v626, %v629
    %v632 = vmul.u32 %v627, %v628
    %v633 = vmul.u32 %v627, %v629
    %v634 = vshll.u32 %v631, 16
    %v635 = vshrl.u32 %v631, 16
    %v636 = vshll.u32 %v632, 16
    %v637 = vshrl.u32 %v632, 16
    %vm638 = vc.u32 %v630, %v634
    %v639 = vsel %vm638, 1, 0
    %v640 = vadd.s32 %v630, %v634
    %v641 = vadd.s32 %v633, %v639
    %vm642 = vc.u32 %v640, %v636
    %v643 = vsel %vm642, 1, 0
    %v644 = vadd.s32 %v640, %v636
    %v645 = vadd.s32 %v641, %v643
    %v646 = vadd.s32 %v645, %v635
    %v647 = vadd.s32 %v646, %v637
    %v648 = vand.u32 %v625, 65535
    %v649 = vshrl.u32 %v625, 16
    %v650 = vand.u32 %v620, 65535
    %v651 = vshrl.u32 %v620, 16
    %v652 = vmul.u32 %v648, %v650
    %v653 = vmul.u32 %v648, %v651
    %v654 = vmul.u32 %v649, %v650
    %v655 = vmul.u32 %v649, %v651
    %v656 = vshll.u32 %v653, 16
    %v657 = vshrl.u32 %v653, 16
    %v658 = vshll.u32 %v654, 16
    %v659 = vshrl.u32 %v654, 16
    %vm660 = vc.u32 %v652, %v656
    %v661 = vsel %vm660, 1, 0
    %v662 = vadd.s32 %v652, %v656
    %v663 = vadd.s32 %v655, %v661
    %vm664 = vc.u32 %v662, %v658
    %v665 = vsel %vm664, 1, 0
    %v666 = vadd.s32 %v662, %v658
    %v667 = vadd.s32 %v663, %v665
    %v668 = vadd.s32 %v667, %v657
    %v669 = vadd.s32 %v668, %v659
    %v670 = vmul.u32 %v625, %v616
    %v671 = vadd.s32 %v647, %v666
    %vm672 = vc.u32 %v647, %v666
    %v673 = vadd.s32 %v669, 1
    %v674 = vsel %vm672, %v673, %v669
    %v675 = vadd.s32 %v670, %v674
    %v676 = vadd.s32 %v675, 536870912
    %v677 = vshrl.u32 %v676, 30
    %v678 = vshll.u32 %v677, 30
    %v679 = vsub.s32 %v675, %v678
    %vm680 = vcmp.lt.s32.totalorder %v679, 0
    %v681 = vsub.s32 0, %v679
    %v682 = vsel %vm680, %v681, %v679
    %v683 = vclz %v682
    %v684 = vsub.s32 %v683, 2
    %vm685 = vcmp.gt.s32.totalorder 0, %v684
    %v686 = vsel %vm685, 0, %v684
    %v687 = vsub.s32 32, %v686
    %v688 = vshll.u32 %v679, %v686
    %v689 = vshrl.u32 %v671, %v687
    %v690 = vor.u32 %v688, %v689
    %v691 = vsub.s32 4294967266, %v686
    %v692 = vadd.s32 %v691, 127
    %v693 = vshll.u32 %v692, 23
    %v694 = vor.u32 4788187, %v693
    %v695 = vand.u32 2147483647, %v694
    %v697 = vcvt.s32.f32 %v690
    %v698 = vmul.f32 %v697, %v695
    %v699 = vxor.u32 %v698, 2147483648
    %v700 = vsel %vm579, %v699, %v698
    %v701 = vsub.s32 4, %v677
    %v702 = vsel %vm579, %v701, %v677
    %v703 = vsel %vm578, %v111, %v700
    %v704 = vsel %vm578, 0, %v702
    %v705 = vmul.f32 %v703, %v703
    %v706 = vmul.f32 %v705, -0.001358992
    %v707 = vadd.f32 %v706, 0.041655596
    %v708 = vmul.f32 %v705, %v707
    %v709 = vadd.f32 %v708, -0.4999988
    %v710 = vmul.f32 %v705, %v709
    %v711 = vadd.f32 1.0, %v710
    %v712 = vmul.f32 %v703, %v703
    %v713 = vmul.f32 %v712, -0.00019511016
    %v714 = vadd.f32 %v713, 0.008332121
    %v715 = vmul.f32 %v712, %v714
    %v716 = vadd.f32 %v715, -0.16666654
    %v717 = vmul.f32 %v712, %v716
    %v718 = vadd.f32 %v717, 1.0
    %v719 = vmul.f32 %v718, %v703
    %vm720 = vweird.f32 %v111
    %v721 = vadd.s32 %v704, 3
    %v722 = vand.u32 %v721, 3
    %vm723 = vcmp.lt.s32.totalorder %v722, 2
    %vm724 = vcmp.eq.s32.totalorder %v722, 0
    %v725 = vxor.u32 %v719, 2147483648
    %v726 = vsel %vm724, %v711, %v725
    %vm727 = vcmp.eq.s32.totalorder %v722, 2
    %v728 = vxor.u32 %v711, 2147483648
    %v729 = vsel %vm727, %v728, %v719
    %v730 = vsel %vm723, %v726, %v729
    %v731 = vsel %vm720, nan, %v730
    %v732 = vmul.f32 %v97, %v576
    %v733 = vmul.f32 %v109, %v731
    %734 = vst [vmem:[#allocation3] sm:$0xff] %v420
    %735 = vst [vmem:[#allocation3 + $0x8] sm:$0xff] %v421
    %736 = vst [vmem:[#allocation3 + $0x10] sm:$0xff] %v732
    %737 = vst [vmem:[#allocation3 + $0x18] sm:$0xff] %v733
    // Predicated region
    $region6: #{tpu_custom_call.1} parent=1 // pred_check
      _
    $region7: #{tpu_custom_call.1} parent=1 // pred_check_branch
      %739 = sbr.rel (0) target = $region9
    $region8: #{tpu_custom_call.1} parent=1 // pred_region
      %741 = vsyncadd [#allocation4], 0
      %s742 = sshll.u32 [#allocation3], 4
      %s743 = int_to_ptr.vmem [resolvable:$true] %s742
      %s744 = sshll.u32 %s1, 4
      %s745 = int_to_ptr.hbm [resolvable:$true] %s744
      %750 = dma.vmem_to_hbm [thread:$0]  %s743, 512, %s745, [#allocation4], 256, 256, 16
    $region9: #{tpu_custom_call.1} parent=1 // pred_fallthru
      _
    // Predicated region
    $region10: #{tpu_custom_call.1} parent=1 // pred_check
      _
    $region11: #{tpu_custom_call.1} parent=1 // pred_check_branch
      %752 = sbr.rel (0) target = $region13
    $region12: #{tpu_custom_call.1} parent=1 // pred_region
      %754 = dma.done [#allocation4], 512
    $region13: #{tpu_custom_call.1} parent=1 // pred_fallthru
      _
    %755 = vsyncpa [#allocation4], 1

</llo_original>
